<compile_context>
chip_gen: v7x
topology: tpu7x:2x2x1
jax: 0.10.0
libtpu: 0.0.40
codegen_flags: <defaults>
</compile_context>

<pallas_src>
import functools

import jax
import jax.numpy as jnp
from jax.experimental import pallas as pl
from jax.experimental.pallas import tpu as pltpu


def _round_up(x: int, m: int) -> int:
    return (x + m - 1) // m * m


def _vmem_capacity_bytes() -> int:
    """Physical VMEM per core; falls back to the v7x floor (64 MiB)."""
    try:
        return int(pltpu.get_tpu_info().vmem_capacity_bytes)
    except Exception:  # pragma: no cover - info query is best-effort
        return 64 * 1024 * 1024


# ---------------------------------------------------------------------------
# Pallas kernel: o[i, j] tile = x[i] @ w[:, j] + b[j]   (f32 accumulate)
# ---------------------------------------------------------------------------
def _matmul_bias_kernel(x_ref, w_ref, b_ref, o_ref, *, mxu_dtype):
    x = x_ref[...]
    w = w_ref[...]
    if mxu_dtype is not None:
        # bf16 MXU operands with f32 accumulation (review: 2-4x on f32 params).
        x = x.astype(mxu_dtype)
        w = w.astype(mxu_dtype)
    acc = jnp.dot(x, w, preferred_element_type=jnp.float32)
    o_ref[...] = (acc + b_ref[...].astype(jnp.float32)).astype(o_ref.dtype)


def matmul_bias(x, w, b, *, block_m=256, block_n=4096, out_dtype=None,
                mxu_dtype=None):
    """x: (M, K), w: (K, N), b: (N,) -> (M, N) tiled Pallas TPU matmul+bias.

    Grid is (column_tiles, row_tiles) with the column axis OUTER so the weight
    matrix is streamed from HBM exactly once (the small x row tiles are
    re-fetched per column tile instead).  Rows are padded to a sublane
    multiple; columns are tiled with a divisor of N whenever N is a multiple
    of 128 (no weight padding), otherwise padded as a fallback.
    """
    M, K = x.shape
    K2, N = w.shape
    assert K == K2 and b.shape == (N,)
    out_dtype = jnp.dtype(x.dtype if out_dtype is None else out_dtype)

    x_sz = jnp.dtype(x.dtype).itemsize
    w_sz = jnp.dtype(w.dtype).itemsize
    o_sz = out_dtype.itemsize

    # --- row tile (sublane multiple depends on dtype packing) ---------------
    sub = max(8, 32 // x_sz)          # 8 for f32, 16 for bf16, 32 for int8/fp8
    bm = block_m if M >= block_m else _round_up(M, sub)
    M_pad = _round_up(M, bm)

    # --- column tile ---------------------------------------------------------
    if N <= block_n:
        bn, N_pad = N, N                          # single full-width tile
    elif N % 128 == 0:
        bn = 128                                  # largest 128-multiple dividing N
        cand = block_n - block_n % 128
        while cand >= 128:
            if N % cand == 0:
                bn = cand
                break
            cand -= 128
        N_pad = N
    else:
        # TODO(synk): fallback materializes a padded copy of w/b in HBM; only
        # hit when N is not a 128-multiple and exceeds block_n.
        bn = block_n - block_n % 128
        N_pad = _round_up(N, bn)

    if M_pad != M:
        x = jnp.pad(x, ((0, M_pad - M), (0, 0)))
    if N_pad != N:
        w = jnp.pad(w, ((0, 0), (0, N_pad - N)))
        b = jnp.pad(b, (0, N_pad - N))
    b2d = b.reshape(1, N_pad)

    n_col = N_pad // bn
    n_row = M_pad // bm
    grid = (n_col, n_row)                         # column axis outer

    # --- generation-aware VMEM limit derived from tile sizes -----------------
    tile_bytes = (bm * K * x_sz + K * bn * w_sz + bn * w_sz + bm * bn * o_sz)
    need = 2 * tile_bytes                         # double-buffered pipeline
    cap = _vmem_capacity_bytes()
    vmem_limit = int(min(int(0.85 * cap),
                         max(int(need * 1.3) + (4 << 20), 32 << 20)))

    bytes_accessed = (M_pad * K * x_sz * n_col      # x re-read per column tile
                      + K * N_pad * w_sz            # w streamed once
                      + N_pad * w_sz
                      + M_pad * N_pad * o_sz)

    kernel = functools.partial(_matmul_bias_kernel, mxu_dtype=mxu_dtype)

    out = pl.pallas_call(
        kernel,
        out_shape=jax.ShapeDtypeStruct((M_pad, N_pad), out_dtype),
        grid=grid,
        in_specs=[
            pl.BlockSpec((bm, K), lambda jc, ir: (ir, 0)),   # small x row tile
            pl.BlockSpec((K, bn), lambda jc, ir: (0, jc)),   # streamed w column tile
            pl.BlockSpec((1, bn), lambda jc, ir: (0, jc)),   # matching bias tile
        ],
        out_specs=pl.BlockSpec((bm, bn), lambda jc, ir: (ir, jc)),
        compiler_params=pltpu.CompilerParams(
            dimension_semantics=("parallel", "parallel"),
            vmem_limit_bytes=vmem_limit,
        ),
        cost_estimate=pl.CostEstimate(
            flops=2 * M_pad * N_pad * K,
            transcendentals=0,
            bytes_accessed=bytes_accessed,
        ),
    )(x, w, b2d)

    if M_pad != M or N_pad != N:
        out = out[:M, :N]
    return out


# ---------------------------------------------------------------------------
# SharedWeightsHypernet (forward only)
# ---------------------------------------------------------------------------
class SharedWeightsHypernet:
    def __init__(self, f_size=3, z_dim=512, out_size=512, in_size=512,
                 mode=None, *, key=None, dtype=jnp.float32, param_dtype=None,
                 mxu_dtype=None):
        self.mode = mode
        self.z_dim = z_dim
        self.f_size = 1 if mode == "delta_per_channel" else f_size
        self.out_size = out_size
        self.in_size = in_size
        self.dtype = jnp.dtype(dtype)
        self.param_dtype = jnp.dtype(dtype if param_dtype is None else param_dtype)
        self.mxu_dtype = mxu_dtype   # None => use stored operand dtype on MXU

        if key is None:
            key = jax.random.PRNGKey(0)
        k1, k2, k3, k4 = jax.random.split(key, 4)

        def init(k, shape):
            # torch.fmod(torch.randn(shape) / 40, 2)
            v = jnp.fmod(jax.random.normal(k, shape, jnp.float32) / 40.0, 2.0)
            return v.astype(self.param_dtype)

        fe = self.out_size * self.f_size * self.f_size
        self.w1 = init(k1, (self.z_dim, fe))
        self.b1 = init(k2, (fe,))
        self.w2 = init(k3, (self.z_dim, self.in_size * self.z_dim))
        self.b2 = init(k4, (self.in_size * self.z_dim,))

    def __call__(self, z):
        z = z.astype(self.dtype)
        batch_size = z.shape[0]

        # ----- stage 1: HBM-bandwidth bound stream over w2 -------------------
        # One large row block keeps all batch rows resident; the column grid
        # axis is outermost so the 512 MiB w2 is streamed exactly once.
        bn1 = 8192 if self.param_dtype.itemsize <= 2 else 4096
        h_in = matmul_bias(z, self.w2, self.b2,
                           block_m=512, block_n=bn1,
                           out_dtype=self.dtype, mxu_dtype=self.mxu_dtype)

        # view(B, in_size, z_dim) + batched matmul == flatten batch & in_size
        h_in_2d = h_in.reshape(batch_size * self.in_size, self.z_dim)

        # ----- stage 2: MXU bound --------------------------------------------
        # (z_dim, out*f*f) weight tile stays resident; 256-row MXU tiles.
        h_final = matmul_bias(h_in_2d, self.w1, self.b1,
                              block_m=256, block_n=4608,
                              out_dtype=self.dtype, mxu_dtype=self.mxu_dtype)

        # contiguous reshape, identical to PyTorch .view(...)
        kernel = h_final.reshape(batch_size, self.out_size, self.in_size,
                                 self.f_size, self.f_size)

        if self.mode == "delta_per_channel":
            # repeat(1,1,1,3,3) on size-1 f dims == broadcast; lets XLA fuse
            # the 9x expansion into the consumer instead of an HBM rewrite.
            kernel = jnp.broadcast_to(
                kernel, (batch_size, self.out_size, self.in_size, 3, 3))
        return kernel


# ---------------------------------------------------------------------------
# pure-JAX (f32, HIGHEST precision) reference for sanity checks
# ---------------------------------------------------------------------------
def reference_forward(net, z):
    B = z.shape[0]
    hp = jax.lax.Precision.HIGHEST
    w1 = net.w1.astype(jnp.float32)
    b1 = net.b1.astype(jnp.float32)
    w2 = net.w2.astype(jnp.float32)
    b2 = net.b2.astype(jnp.float32)
    zf = z.astype(jnp.float32)
    h_in = (jnp.dot(zf, w2, precision=hp) + b2).reshape(B, net.in_size, net.z_dim)
    h_final = jnp.einsum("bik,kn->bin", h_in, w1, precision=hp) + b1
    k = h_final.reshape(B, net.out_size, net.in_size, net.f_size, net.f_size)
    if net.mode == "delta_per_channel":
        k = jnp.broadcast_to(k, (B, net.out_size, net.in_size, 3, 3))
    return k


if __name__ == "__main__":
    # small, forward-consistent shapes
    batch, z_dim, in_size, out_size, f_size = 2, 32, 8, 8, 3
    z = jax.random.normal(jax.random.PRNGKey(0), (batch, z_dim), jnp.float32)

    # --- f32 path (tight tolerance, exact PyTorch-style semantics) ----------
    net_f32 = SharedWeightsHypernet(
        f_size=f_size, z_dim=z_dim, out_size=out_size, in_size=in_size,
        mode=None, key=jax.random.PRNGKey(1), dtype=jnp.float32,
    )
    out = jax.block_until_ready(net_f32(z))
    assert out.shape == (batch, out_size, in_size, f_size, f_size), out.shape
    ref = jax.block_until_ready(reference_forward(net_f32, z))
    assert jnp.allclose(out, ref, atol=2e-5, rtol=2e-5), "f32 mismatch vs reference"

    # --- f32 params, bf16 MXU operands (fast path, f32 accumulation) --------
    net_f32_bf16mxu = SharedWeightsHypernet(
        f_size=f_size, z_dim=z_dim, out_size=out_size, in_size=in_size,
        mode=None, key=jax.random.PRNGKey(1), dtype=jnp.float32,
        mxu_dtype=jnp.bfloat16,
    )
    out_fast = jax.block_until_ready(net_f32_bf16mxu(z))
    assert jnp.allclose(out_fast, ref, atol=3e-2, rtol=3e-2), \
        "bf16-MXU mismatch vs reference"

    # --- bf16 params / activations (memory-bound w2 stream halved) ----------
    net_bf16 = SharedWeightsHypernet(
        f_size=f_size, z_dim=z_dim, out_size=out_size, in_size=in_size,
        mode=None, key=jax.random.PRNGKey(1), dtype=jnp.bfloat16,
    )
    out_bf16 = jax.block_until_ready(net_bf16(z))
    ref_bf16 = jax.block_until_ready(reference_forward(net_bf16, z))
    assert out_bf16.shape == (batch, out_size, in_size, f_size, f_size)
    assert jnp.allclose(out_bf16.astype(jnp.float32), ref_bf16,
                        atol=5e-2, rtol=5e-2), "bf16 mismatch vs reference"

    # --- delta_per_channel mode (f_size forced to 1, 3x3 broadcast) ---------
    net_dpc = SharedWeightsHypernet(
        f_size=f_size, z_dim=z_dim, out_size=out_size, in_size=in_size,
        mode="delta_per_channel", key=jax.random.PRNGKey(2), dtype=jnp.float32,
    )
    out_dpc = jax.block_until_ready(net_dpc(z))
    assert out_dpc.shape == (batch, out_size, in_size, 3, 3), out_dpc.shape
    ref_dpc = jax.block_until_ready(reference_forward(net_dpc, z))
    assert jnp.allclose(out_dpc, ref_dpc, atol=2e-5, rtol=2e-5), \
        "delta_per_channel mismatch vs reference"

    print("KERNEL_OK")
</pallas_src>

<mosaic_0001>
module attributes {stable_mosaic.version = 11 : i64} {
  func.func @_matmul_bias_kernel(%arg0: i32, %arg1: i32, %arg2: memref<8x32xf32, #tpu.memory_space<vmem>>, %arg3: memref<32x256xf32, #tpu.memory_space<vmem>>, %arg4: memref<1x256xf32, #tpu.memory_space<vmem>>, %arg5: memref<8x256xf32, #tpu.memory_space<vmem>>) attributes {dimension_semantics = [#tpu.dimension_semantics<parallel>, #tpu.dimension_semantics<parallel>], iteration_bounds = array<i64: 1, 1>, scalar_prefetch = 0 : i64, scratch_operands = 0 : i64, tpu.core_type = #tpu.core_type<tc>, window_params = [{transform_indices = @transform_0, window_bounds = array<i64: 8, 32>}, {transform_indices = @transform_1, window_bounds = array<i64: 32, 256>}, {transform_indices = @transform_2, window_bounds = array<i64: 1, 256>}, {transform_indices = @transform_3, window_bounds = array<i64: 8, 256>}]} {
    %c0 = arith.constant 0 : index
    %c0_0 = arith.constant 0 : index
    %0 = vector.load %arg2[%c0, %c0_0] : memref<8x32xf32, #tpu.memory_space<vmem>>, vector<8x32xf32>
    %c0_1 = arith.constant 0 : index
    %c0_2 = arith.constant 0 : index
    %1 = vector.load %arg3[%c0_1, %c0_2] : memref<32x256xf32, #tpu.memory_space<vmem>>, vector<32x256xf32>
    %cst = arith.constant dense<0.000000e+00> : vector<8x256xf32>
    %2 = tpu.matmul %0, %1, %cst {dimension_numbers = #tpu.dot_dimension_numbers<[1], [0], [0], [1], [0, 0, 1, 1], [], []>} : vector<8x32xf32>, vector<32x256xf32>, vector<8x256xf32> -> vector<8x256xf32>
    %c0_3 = arith.constant 0 : index
    %c0_4 = arith.constant 0 : index
    %3 = vector.load %arg4[%c0_3, %c0_4] : memref<1x256xf32, #tpu.memory_space<vmem>>, vector<1x256xf32>
    %4 = vector.broadcast %3 : vector<1x256xf32> to vector<8x256xf32>
    %5 = arith.addf %2, %4 : vector<8x256xf32>
    %c0_5 = arith.constant 0 : index
    %c0_6 = arith.constant 0 : index
    %6 = vector.load %arg5[%c0_5, %c0_6] : memref<8x256xf32, #tpu.memory_space<vmem>>, vector<8x256xf32>
    tpu.vector_store %arg5[%c0_5, %c0_6], %5 {strides = array<i32>} : memref<8x256xf32, #tpu.memory_space<vmem>>, vector<8x256xf32>,
    return
  }
  func.func @transform_0(%arg0: i32, %arg1: i32) -> (i32, i32) {
    %c0_i32 = arith.constant 0 : i32
    %c0_i32_0 = arith.constant 0 : i32
    return %arg1, %c0_i32 : i32, i32
  }
  func.func @transform_1(%arg0: i32, %arg1: i32) -> (i32, i32) {
    %c0_i32 = arith.constant 0 : i32
    %c0_i32_0 = arith.constant 0 : i32
    return %c0_i32, %arg0 : i32, i32
  }
  func.func @transform_2(%arg0: i32, %arg1: i32) -> (i32, i32) {
    %c0_i32 = arith.constant 0 : i32
    %c0_i32_0 = arith.constant 0 : i32
    return %c0_i32, %arg0 : i32, i32
  }
  func.func @transform_3(%arg0: i32, %arg1: i32) -> (i32, i32) {
    %c0_i32 = arith.constant 0 : i32
    return %arg1, %arg0 : i32, i32
  }
}

</mosaic_0001>

<llo_original>
// kernel: tpu_custom_call.1
$region0: #{tpu_custom_call.1}
  #allocation0 [shape = 'u32[]', space=smem, size = 0x4, offset = 0x4, fixed_abs, tag = 'smem constant byte address 0x4 - core index']
  #allocation1 [shape = 'u32[144,128]{1,0:T(1,128)}', space=vmem, size = 0x12000, scoped, tag = 'internal scratch']
  %s0 = inlined_call_operand.hbm [shape: f32[8,32], index: 0, kind: input, shape index: {}]
  %s1 = inlined_call_operand.hbm [shape: f32[32,256], index: 1, kind: input, shape index: {}]
  %s2 = inlined_call_operand.vmem [shape: f32[1,256], index: 2, kind: input, shape index: {}]
  %s3 = inlined_call_operand.hbm [shape: f32[8,256], index: 3, kind: output, shape index: {}]
  %s4 = sld [smem:[#allocation0]]
  $region30: #{tpu_custom_call.1} parent=0
    _
  %s6 = ssub.s32 1, %s4
  %s7 = scalar_select 0, %s6, %s4
  $region1: #{tpu_custom_call.1} parent=0
    #allocation2 [shape = 'u8[4096]{0}', space=vmem, size = 0x1000, scoped, tag = 'input window, operand 0, single buffered']
    #allocation3 [shape = 's32[1]{0}', space=sflag, size = 0x4, scoped, tag = 'scoped memory for tpu_custom_call.1']
    #allocation4 [shape = 's32[1]{0}', space=sflag, size = 0x4, scoped, tag = 'scoped memory for tpu_custom_call.1']
    #allocation5 [shape = 'u8[32768]{0}', space=vmem, size = 0x8000, scoped, tag = 'input window, operand 1, single buffered']
    #allocation6 [shape = 's32[1]{0}', space=sflag, size = 0x4, scoped, tag = 'scoped memory for tpu_custom_call.1']
    #allocation7 [shape = 'u8[8192]{0}', space=vmem, size = 0x2000, scoped, tag = 'output window, operand 0, single buffered']
    %8 = vsyncpa [#allocation3], 0
    %9 = vsyncpa [#allocation6], 0
    %10 = vsyncpa [#allocation4], 0
    // Predicated region
    $region2: #{tpu_custom_call.1} parent=1 // pred_check
      _
    $region3: #{tpu_custom_call.1} parent=1 // pred_check_branch
      %12 = sbr.rel (0) target = $region5
    $region4: #{tpu_custom_call.1} parent=1 // pred_region
      %s14 = ssub.s32 128, 128
      %15 = vsyncadd [#allocation3], %s14
      %s17 = sshll.u32 [#allocation2], 4
      %s18 = int_to_ptr.vmem [resolvable:$true] %s17
      %20 = dma.hbm_to_vmem [thread:$0]  %s0, 128, %s18, [#allocation3]
    $region5: #{tpu_custom_call.1} parent=1 // pred_fallthru
      _
    // Predicated region
    $region6: #{tpu_custom_call.1} parent=1 // pred_check
      _
    $region7: #{tpu_custom_call.1} parent=1 // pred_check_branch
      %22 = sbr.rel (0) target = $region9
    $region8: #{tpu_custom_call.1} parent=1 // pred_region
      %s24 = ssub.s32 1024, 1024
      %25 = vsyncadd [#allocation6], %s24
      %s26 = sshll.u32 [#allocation5], 4
      %s27 = int_to_ptr.vmem [resolvable:$true] %s26
      %32 = dma.hbm_to_vmem [thread:$0]  %s1, 1024, %s27, [#allocation6], 256, 256, 16
    $region9: #{tpu_custom_call.1} parent=1 // pred_fallthru
      _
    // Predicated region
    $region10: #{tpu_custom_call.1} parent=1 // pred_check
      _
    $region11: #{tpu_custom_call.1} parent=1 // pred_check_branch
      %34 = sbr.rel (0) target = $region13
    $region12: #{tpu_custom_call.1} parent=1 // pred_region
      _
    $region13: #{tpu_custom_call.1} parent=1 // pred_fallthru
      _
    // Predicated region
    $region14: #{tpu_custom_call.1} parent=1 // pred_check
      _
    $region15: #{tpu_custom_call.1} parent=1 // pred_check_branch
      %36 = sbr.rel (0) target = $region17
    $region16: #{tpu_custom_call.1} parent=1 // pred_region
      %37 = dma.done [#allocation3], 128
    $region17: #{tpu_custom_call.1} parent=1 // pred_fallthru
      _
    // Predicated region
    $region18: #{tpu_custom_call.1} parent=1 // pred_check
      _
    $region19: #{tpu_custom_call.1} parent=1 // pred_check_branch
      %39 = sbr.rel (0) target = $region21
    $region20: #{tpu_custom_call.1} parent=1 // pred_region
      %40 = dma.done [#allocation6], 1024
    $region21: #{tpu_custom_call.1} parent=1 // pred_fallthru
      _
    %v41 = vld [vmem:[#allocation2] sm:$0xff]
    %v42 = vld [vmem:[#allocation5] sm:$0xff]
    %v43 = vld [vmem:[#allocation5 + $0x8] sm:$0xff]
    %v44 = vld [vmem:[#allocation5 + $0x10] sm:$0xff]
    %v45 = vld [vmem:[#allocation5 + $0x18] sm:$0xff]
    %v46 = vld [vmem:[#allocation5 + $0x20] sm:$0xff]
    %v47 = vld [vmem:[#allocation5 + $0x28] sm:$0xff]
    %v48 = vld [vmem:[#allocation5 + $0x30] sm:$0xff]
    %v49 = vld [vmem:[#allocation5 + $0x38] sm:$0xff]
    %v50 = vld [vmem:[%s2] sm:$0x3]
    %v52 = vlaneseq
    %v53 = vshrl.u32 %v52, 7
    %v54 = vsub.s32 0, %v53
    %v55 = vrot.slane %v50, %v54
    %v56 = vlaneseq
    %v57 = vshrl.u32 %v56, 7
    %v58 = vsub.s32 1, %v57
    %v59 = vrot.slane %v50, %v58
    %vm62 = vcmask 261120
    %v64 = vsel %vm62, %v41, 0
    %66 = vmatprep.subr.mxu0 %v43
    %67 = vmatpush1.msra.mxu0 %v42
    %68 = vmatprep.subr.mxu0 %v45
    %69 = vmatpush1.msra.mxu0 %v44
    %70 = vmatprep.subr.mxu0 %v47
    %71 = vmatpush1.msra.mxu0 %v46
    %72 = vmatprep.subr.mxu0 %v49
    %73 = vmatpush1.msra.mxu0 %v48
    %74 = vmatprep.subr.mxu0 0.0
    %75 = vmatpush1.msra.mxu0 0.0
    %76 = vmatprep.subr.mxu0 0.0
    %77 = vmatpush1.msra.mxu0 0.0
    %78 = vmatprep.subr.mxu0 0.0
    %79 = vmatpush1.msra.mxu0 0.0
    %80 = vmatprep.subr.mxu0 0.0
    %81 = vmatpush1.msra.mxu0 0.0
    %82 = vmatprep.subr.mxu0 0.0
    %83 = vmatpush1.msra.mxu0 0.0
    %84 = vmatprep.subr.mxu0 0.0
    %85 = vmatpush1.msra.mxu0 0.0
    %86 = vmatprep.subr.mxu0 0.0
    %87 = vmatpush1.msra.mxu0 0.0
    %88 = vmatprep.subr.mxu0 0.0
    %89 = vmatpush1.msra.mxu0 0.0
    %90 = vmatprep.subr.mxu0 0.0
    %91 = vmatpush1.msra.mxu0 0.0
    %92 = vmatprep.subr.mxu0 0.0
    %93 = vmatpush1.msra.mxu0 0.0
    %94 = vmatprep.subr.mxu0 0.0
    %95 = vmatpush1.msra.mxu0 0.0
    %96 = vmatprep.subr.mxu0 0.0
    %97 = vmatpush1.msra.mxu0 0.0
    %98 = vmatprep.subr.mxu0 0.0
    %99 = vmatpush1.msra.mxu0 0.0
    %100 = vmatprep.subr.mxu0 0.0
    %101 = vmatpush1.msra.mxu0 0.0
    %102 = vmatprep.subr.mxu0 0.0
    %103 = vmatpush1.msra.mxu0 0.0
    %104 = vmatprep.subr.mxu0 0.0
    %105 = vmatpush1.msra.mxu0 0.0
    %106 = vmatprep.subr.mxu0 0.0
    %107 = vmatpush1.msra.mxu0 0.0
    %108 = vmatprep.subr.mxu0 0.0
    %109 = vmatpush1.msra.mxu0 0.0
    %110 = vmatprep.subr.mxu0 0.0
    %111 = vmatpush1.msra.mxu0 0.0
    %112 = vmatprep.subr.mxu0 0.0
    %113 = vmatpush1.msra.mxu0 0.0
    %114 = vmatprep.subr.mxu0 0.0
    %115 = vmatpush1.msra.mxu0 0.0
    %116 = vmatprep.subr.mxu0 0.0
    %117 = vmatpush1.msra.mxu0 0.0
    %118 = vmatprep.subr.mxu0 0.0
    %119 = vmatpush1.msra.mxu0 0.0
    %120 = vmatprep.subr.mxu0 0.0
    %121 = vmatpush1.msra.mxu0 0.0
    %122 = vmatprep.subr.mxu0 0.0
    %123 = vmatpush1.msra.mxu0 0.0
    %124 = vmatprep.subr.mxu0 0.0
    %125 = vmatpush1.msra.mxu0 0.0
    %126 = vmatprep.subr.mxu0 0.0
    %127 = vmatpush1.msra.mxu0 0.0
    %128 = vmatprep.subr.mxu0 0.0
    %129 = vmatpush1.msra.mxu0 0.0
    %130 = vmatprep.mubr.f32.mxu0 0.0
    %131 = vmatmul.mubr.f32.gmra.mrb[0].mxu0 %v64
    %v132 = vpop.f32.mrb[0].mxu0
    %v133 = vadd.f32 %v55, %v132
    %v134 = vpop.f32.mrb[0].mxu0
    %v135 = vadd.f32 %v59, %v134
    %136 = vdwg.mxu0
    %137 = vst [vmem:[#allocation7] sm:$0xff] %v133
    %138 = vst [vmem:[#allocation7 + $0x8] sm:$0xff] %v135
    // Predicated region
    $region22: #{tpu_custom_call.1} parent=1 // pred_check
      _
    $region23: #{tpu_custom_call.1} parent=1 // pred_check_branch
      %140 = sbr.rel (0) target = $region25
    $region24: #{tpu_custom_call.1} parent=1 // pred_region
      %s142 = ssub.s32 256, 256
      %143 = vsyncadd [#allocation4], %s142
      %s145 = sshll.u32 [#allocation7], 4
      %s146 = int_to_ptr.vmem [resolvable:$true] %s145
      %148 = dma.vmem_to_hbm [thread:$0]  %s146, 256, %s3, [#allocation4]
    $region25: #{tpu_custom_call.1} parent=1 // pred_fallthru
      _
    // Predicated region
    $region26: #{tpu_custom_call.1} parent=1 // pred_check
      _
    $region27: #{tpu_custom_call.1} parent=1 // pred_check_branch
      %150 = sbr.rel (0) target = $region29
    $region28: #{tpu_custom_call.1} parent=1 // pred_region
      %151 = dma.done [#allocation4], 256
    $region29: #{tpu_custom_call.1} parent=1 // pred_fallthru
      _
    %152 = vsyncpa [#allocation3], 1
    %153 = vsyncpa [#allocation6], 1
    %154 = vsyncpa [#allocation4], 1

</llo_original>
